<compile_context>
chip_gen: v7x
topology: tpu7x:2x2x1
jax: 0.10.0
libtpu: 0.0.40
codegen_flags: <defaults>
</compile_context>

<pallas_src>
import jax
import jax.numpy as jnp
from jax.experimental import pallas as pl
from jax.experimental.pallas import tpu as pltpu


def _scm_linear_kernel(x_ref, w_ref, b_ref, o_ref):
    """One (batch, T-tile) step of y = flatten(transpose(x)) @ W^T + b.

    x_ref: (K, tT)  activation tile in natural channel-major layout (K = 2M)
    w_ref: (K, E)   column-permuted weight (resident in VMEM)
    b_ref: (1, E)   bias (resident in VMEM)
    o_ref: (tT, E)  output tile
    """
    # Transposed-LHS MXU matmul: contraction on the tiny K axis, the large T
    # dimension streams on lanes, result lands directly in (tT, E) layout.
    acc = jnp.dot(x_ref[...].T, w_ref[...], preferred_element_type=jnp.float32)
    o_ref[...] = (acc + b_ref[...].astype(jnp.float32)).astype(o_ref.dtype)


def _choose_t_tile(T, K, E, budget_bytes=24 << 20):
    """Largest lane-aligned (multiple-of-128) T tile whose double-buffered
    working set stays comfortably under the scoped-VMEM default (v7x-safe)."""
    if T <= 128:
        return T                                  # a full dim is always a legal block
    bytes_per_row = 4 * 2 * (K + E)               # f32 x-row + y-row, double-buffered
    max_rows = max(128, budget_bytes // bytes_per_row)
    t_tile = min(T, max_rows, 2048)
    return max(128, (t_tile // 128) * 128)


def scm_embeding_forward(x, weight, bias, *, t_tile=None, compute_dtype=None):
    """x: (B, 2, M, T); weight: (E, 2*M) (torch layout); bias: (E,) -> (B, T, E)."""
    B, C, M, T = x.shape
    assert C == 2, "expected 2 channels in dim -3"
    E, K = weight.shape
    assert K == 2 * M

    # Free reshape (merges adjacent contiguous dims): (B, 2, M, T) -> (B, 2M, T).
    # Feature index of this layout is k' = c*M + m.
    x2 = x.reshape(B, K, T)

    # One-time permutation of the *tiny* weight so its rows follow k' = c*M + m
    # (torch's flatten after transpose(-1, -3) uses k = m*2 + c).
    w_kE = jnp.transpose(weight.reshape(E, M, 2), (2, 1, 0)).reshape(K, E)
    b_1E = bias.reshape(1, E)

    # Optional bf16 streaming path (halves HBM bytes for x / W); accumulation
    # stays f32 via preferred_element_type. Off by default to match torch f32.
    if compute_dtype is not None:
        x2 = x2.astype(compute_dtype)
        w_kE = w_kE.astype(compute_dtype)

    if t_tile is None:
        t_tile = _choose_t_tile(T, K, E)
    num_t_tiles = pl.cdiv(T, t_tile)

    out_dtype = x.dtype
    out_itemsize = jnp.dtype(out_dtype).itemsize
    cost = pl.CostEstimate(
        flops=2 * B * T * K * E,
        transcendentals=0,
        bytes_accessed=(x2.size * x2.dtype.itemsize
                        + w_kE.size * w_kE.dtype.itemsize
                        + b_1E.size * b_1E.dtype.itemsize
                        + B * T * E * out_itemsize),
    )

    y = pl.pallas_call(
        _scm_linear_kernel,
        out_shape=jax.ShapeDtypeStruct((B, T, E), out_dtype),
        grid=(B, num_t_tiles),
        in_specs=[
            pl.BlockSpec((None, K, t_tile), lambda b, j: (b, 0, j)),  # streamed x
            pl.BlockSpec((K, E), lambda b, j: (0, 0)),                # resident weight
            pl.BlockSpec((1, E), lambda b, j: (0, 0)),                # resident bias
        ],
        out_specs=pl.BlockSpec((None, t_tile, E), lambda b, j: (b, j, 0)),
        compiler_params=pltpu.CompilerParams(
            dimension_semantics=("parallel", "parallel"),
        ),
        cost_estimate=cost,
    )(x2, w_kE, b_1E)
    return y


def _reference(x, weight, bias):
    B, C, M, T = x.shape
    xt = jnp.transpose(x, (0, 3, 2, 1)).reshape(B, T, 2 * M)
    return xt @ weight.T + bias


if __name__ == "__main__":
    key = jax.random.PRNGKey(0)
    fwd = jax.jit(scm_embeding_forward)

    # Case 1: small shapes consistent with the module (B=2, M=4 -> Linear(8, 32), T=8).
    B, M, T, E = 2, 4, 8, 32
    k1, k2, k3, key = jax.random.split(key, 4)
    bound = 1.0 / jnp.sqrt(2.0 * M)
    x = jax.random.normal(k1, (B, 2, M, T), dtype=jnp.float32)
    w = jax.random.uniform(k2, (E, 2 * M), minval=-bound, maxval=bound, dtype=jnp.float32)
    b = jax.random.uniform(k3, (E,), minval=-bound, maxval=bound, dtype=jnp.float32)
    out = jax.block_until_ready(fwd(x, w, b))
    assert out.shape == (B, T, E)
    assert jnp.allclose(out, _reference(x, w, b), atol=1e-4, rtol=1e-4)

    # Case 2: T not divisible by the 128-row tile -> exercises the pl.cdiv /
    # boundary-masked remainder path with lane-aligned tiling.
    B, M, T, E = 2, 8, 160, 64
    k1, k2, k3, key = jax.random.split(key, 4)
    bound = 1.0 / jnp.sqrt(2.0 * M)
    x = jax.random.normal(k1, (B, 2, M, T), dtype=jnp.float32)
    w = jax.random.uniform(k2, (E, 2 * M), minval=-bound, maxval=bound, dtype=jnp.float32)
    b = jax.random.uniform(k3, (E,), minval=-bound, maxval=bound, dtype=jnp.float32)
    out = jax.block_until_ready(fwd(x, w, b))
    assert out.shape == (B, T, E)
    assert jnp.allclose(out, _reference(x, w, b), atol=1e-4, rtol=1e-4)

    print("KERNEL_OK")
</pallas_src>

<mosaic_0001>
module attributes {stable_mosaic.version = 11 : i64} {
  func.func @_scm_linear_kernel(%arg0: i32, %arg1: i32, %arg2: memref<1x8x8xf32, #tpu.memory_space<vmem>>, %arg3: memref<8x32xf32, #tpu.memory_space<vmem>>, %arg4: memref<1x32xf32, #tpu.memory_space<vmem>>, %arg5: memref<1x8x32xf32, #tpu.memory_space<vmem>>) attributes {dimension_semantics = [#tpu.dimension_semantics<parallel>, #tpu.dimension_semantics<parallel>], iteration_bounds = array<i64: 2, 1>, scalar_prefetch = 0 : i64, scratch_operands = 0 : i64, tpu.core_type = #tpu.core_type<tc>, window_params = [{transform_indices = @transform_0, window_bounds = array<i64: 1, 8, 8>}, {pipeline_mode = #tpu.pipeline_mode<synchronous>, transform_indices = @transform_1, window_bounds = array<i64: 8, 32>}, {pipeline_mode = #tpu.pipeline_mode<synchronous>, transform_indices = @transform_2, window_bounds = array<i64: 1, 32>}, {transform_indices = @transform_3, window_bounds = array<i64: 1, 8, 32>}]} {
    %c0 = arith.constant 0 : index
    %c0_0 = arith.constant 0 : index
    %c0_1 = arith.constant 0 : index
    %0 = vector.load %arg2[%c0, %c0_0, %c0_1] : memref<1x8x8xf32, #tpu.memory_space<vmem>>, vector<1x8x8xf32>
    %1 = vector.shape_cast %0 : vector<1x8x8xf32> to vector<8x8xf32>
    %2 = tpu.transpose %1, [1, 0] : vector<8x8xf32> -> vector<8x8xf32>
    %c0_2 = arith.constant 0 : index
    %c0_3 = arith.constant 0 : index
    %3 = vector.load %arg3[%c0_2, %c0_3] : memref<8x32xf32, #tpu.memory_space<vmem>>, vector<8x32xf32>
    %cst = arith.constant dense<0.000000e+00> : vector<8x32xf32>
    %4 = tpu.matmul %2, %3, %cst {dimension_numbers = #tpu.dot_dimension_numbers<[1], [0], [0], [1], [0, 0, 1, 1], [], []>} : vector<8x8xf32>, vector<8x32xf32>, vector<8x32xf32> -> vector<8x32xf32>
    %c0_4 = arith.constant 0 : index
    %c0_5 = arith.constant 0 : index
    %5 = vector.load %arg4[%c0_4, %c0_5] : memref<1x32xf32, #tpu.memory_space<vmem>>, vector<1x32xf32>
    %6 = vector.broadcast %5 : vector<1x32xf32> to vector<8x32xf32>
    %7 = arith.addf %4, %6 : vector<8x32xf32>
    %c0_6 = arith.constant 0 : index
    %c0_7 = arith.constant 0 : index
    %c0_8 = arith.constant 0 : index
    %8 = vector.load %arg5[%c0_6, %c0_7, %c0_8] : memref<1x8x32xf32, #tpu.memory_space<vmem>>, vector<1x8x32xf32>
    %9 = vector.shape_cast %8 : vector<1x8x32xf32> to vector<8x32xf32>
    %10 = vector.shape_cast %7 : vector<8x32xf32> to vector<1x8x32xf32>
    tpu.vector_store %arg5[%c0_6, %c0_7, %c0_8], %10 {strides = array<i32>} : memref<1x8x32xf32, #tpu.memory_space<vmem>>, vector<1x8x32xf32>,
    return
  }
  func.func @transform_0(%arg0: i32, %arg1: i32) -> (i32, i32, i32) {
    %c0_i32 = arith.constant 0 : i32
    %c0_i32_0 = arith.constant 0 : i32
    return %arg0, %c0_i32, %arg1 : i32, i32, i32
  }
  func.func @transform_1(%arg0: i32, %arg1: i32) -> (i32, i32) {
    %c0_i32 = arith.constant 0 : i32
    %c0_i32_0 = arith.constant 0 : i32
    %c0_i32_1 = arith.constant 0 : i32
    return %c0_i32, %c0_i32_0 : i32, i32
  }
  func.func @transform_2(%arg0: i32, %arg1: i32) -> (i32, i32) {
    %c0_i32 = arith.constant 0 : i32
    %c0_i32_0 = arith.constant 0 : i32
    %c0_i32_1 = arith.constant 0 : i32
    return %c0_i32, %c0_i32_0 : i32, i32
  }
  func.func @transform_3(%arg0: i32, %arg1: i32) -> (i32, i32, i32) {
    %c0_i32 = arith.constant 0 : i32
    %c0_i32_0 = arith.constant 0 : i32
    return %arg0, %arg1, %c0_i32 : i32, i32, i32
  }
}

</mosaic_0001>

<llo_original>
// kernel: scm_embeding_forward.1
$region0: #{scm_embeding_forward.1}
  #allocation0 [shape = 'u32[]', space=smem, size = 0x4, offset = 0x4, fixed_abs, tag = 'smem constant byte address 0x4 - core index']
  #allocation1 [shape = 'u32[144,128]{1,0:T(1,128)}', space=vmem, size = 0x12000, scoped, tag = 'internal scratch']
  %s0 = inlined_call_operand.vmem [shape: f32[2,8,8], index: 0, kind: input, shape index: {}]
  %s1 = inlined_call_operand.vmem [shape: f32[8,32], index: 1, kind: input, shape index: {}]
  %s2 = inlined_call_operand.vmem [shape: f32[1,32], index: 2, kind: input, shape index: {}]
  %s3 = inlined_call_operand.hbm [shape: f32[2,8,32], index: 3, kind: output, shape index: {}]
  %s4 = sld [smem:[#allocation0]]
  $region45: #{scm_embeding_forward.1} parent=0
    _
  %s6 = ssub.s32 1, %s4
  %s7 = scalar_select 0, %s6, %s4
  $region1: #{scm_embeding_forward.1} parent=0
    #allocation2 [shape = 'u8[8192]{0}', space=vmem, size = 0x2000, scoped, tag = 'output window, operand 0']
    #allocation3 [shape = 's32[2]{0}', space=sflag, size = 0x8, scoped, tag = 'scoped memory for scm_embeding_forward.1']
    %8 = vsyncpa [#allocation3], 0
    %s9 = scalar_lea.sflag [#allocation3], 1
    %10 = vsyncpa %s9, 0
    loop: start=0, step=1, limit=4
    $region2: #{scm_embeding_forward.1} parent=1 // loop_pre_header
      _
    $region3: #{scm_embeding_forward.1} parent=1 // loop_header
      %s12 = sphi 0, %s16
      %p13 = scmp.ge.s32.totalorder %s12, 4
      %s19 = sphi 0, %s31
      %s20 = sphi 0, %s27
      %s21 = sphi 0, %s19
      %s22 = sphi 0, %s20
      %s23 = sphi 0, %s21
      %s24 = sphi 0, %s22
      %s36 = sphi 0, %s38
      %s39 = sphi 0, %s36
      %s40 = sphi 0, %s39
      %s56 = sphi 0, %s40
      %s60 = sphi 0, %s60
      %s62 = sphi 0, %s60
      %s63 = sphi 0, %s62
      %s77 = sphi 0, %s63
      %s81 = sphi 0, %s81
      %s83 = sphi 0, %s81
      %s84 = sphi 0, %s83
      %s98 = sphi 0, %s84
      %s106 = sphi 0, %s108
      %s109 = sphi 0, %s106
      %s110 = sphi 0, %s109
      %s126 = sphi 0, %s110
    $region4: #{scm_embeding_forward.1} parent=1 // loop_header_branch
      %15 = sbr.rel (%p13) target = $region8
    $region5: #{scm_embeding_forward.1} parent=1 // loop_body
      %s17 = ssub.s32 %s12, 1
      %s18 = ssub.s32 %s12, 2
      %s25 = sadd.s32 1, %s20
      %p26 = scmp.ge.s32.totalorder %s25, 1
      %s27 = scalar_select %p26, 0, %s25
      %s28 = sadd.s32 1, %s19
      %s29 = scalar_select %p26, %s28, %s19
      %p30 = scmp.ge.s32.totalorder %s29, 2
      %s31 = scalar_select %p30, 0, %s29
      %s32 = ssub.s32 %s19, %s31
      %s33 = ssub.s32 %s20, %s27
      %s34 = sor.u32 %s32, %s33
      %p35 = scmp.eq.s32.totalorder %s34, 0
      %s37 = sadd.s32 %s36, 1
      %s38 = scalar_select %p35, %s36, %s37
      %p41 = pneg %p35
      %p42 = scmp.eq.s32.totalorder %s12, 1
      %p43 = por %p41, %p42
      %p44 = scmp.ne.s32.totalorder %s36, %s39
      %p45 = scmp.eq.s32.totalorder %s12, 0
      %p46 = por %p44, %p45
      %p47 = scmp.ne.s32.totalorder %s36, %s39
      %p48 = scmp.eq.s32.totalorder %s17, 1
      %p49 = por %p47, %p48
      %p50 = scmp.ne.s32.totalorder %s39, %s40
      %p51 = scmp.eq.s32.totalorder %s17, 0
      %p52 = por %p50, %p51
      %p53 = scmp.ne.s32.totalorder %s39, %s40
      %p54 = scmp.eq.s32.totalorder %s18, 1
      %p55 = por %p53, %p54
      %p57 = scmp.ne.s32.totalorder %s40, %s56
      %p58 = scmp.eq.s32.totalorder %s18, 0
      %p59 = por %p57, %p58
      %s61 = sadd.s32 %s60, 1
      %p64 = scmp.eq.s32.totalorder %s12, 1
      %p65 = scmp.ne.s32.totalorder %s60, %s62
      %p66 = scmp.eq.s32.totalorder %s12, 0
      %p67 = por %p65, %p66
      %p68 = scmp.ne.s32.totalorder %s60, %s62
      %p69 = scmp.eq.s32.totalorder %s17, 1
      %p70 = por %p68, %p69
      %p71 = scmp.ne.s32.totalorder %s62, %s63
      %p72 = scmp.eq.s32.totalorder %s17, 0
      %p73 = por %p71, %p72
      %p74 = scmp.ne.s32.totalorder %s62, %s63
      %p75 = scmp.eq.s32.totalorder %s18, 1
      %p76 = por %p74, %p75
      %p78 = scmp.ne.s32.totalorder %s63, %s77
      %p79 = scmp.eq.s32.totalorder %s18, 0
      %p80 = por %p78, %p79
      %s82 = sadd.s32 %s81, 1
      %p85 = scmp.eq.s32.totalorder %s12, 1
      %p86 = scmp.ne.s32.totalorder %s81, %s83
      %p87 = scmp.eq.s32.totalorder %s12, 0
      %p88 = por %p86, %p87
      %p89 = scmp.ne.s32.totalorder %s81, %s83
      %p90 = scmp.eq.s32.totalorder %s17, 1
      %p91 = por %p89, %p90
      %p92 = scmp.ne.s32.totalorder %s83, %s84
      %p93 = scmp.eq.s32.totalorder %s17, 0
      %p94 = por %p92, %p93
      %p95 = scmp.ne.s32.totalorder %s83, %s84
      %p96 = scmp.eq.s32.totalorder %s18, 1
      %p97 = por %p95, %p96
      %p99 = scmp.ne.s32.totalorder %s84, %s98
      %p100 = scmp.eq.s32.totalorder %s18, 0
      %p101 = por %p99, %p100
      %s102 = ssub.s32 %s19, %s31
      %s103 = ssub.s32 %s20, %s27
      %s104 = sor.u32 %s102, %s103
      %p105 = scmp.eq.s32.totalorder %s104, 0
      %s107 = sadd.s32 %s106, 1
      %s108 = scalar_select %p105, %s106, %s107
      %p111 = pneg %p105
      %p112 = scmp.eq.s32.totalorder %s12, 1
      %p113 = por %p111, %p112
      %p114 = scmp.ne.s32.totalorder %s106, %s109
      %p115 = scmp.eq.s32.totalorder %s12, 0
      %p116 = por %p114, %p115
      %p117 = scmp.ne.s32.totalorder %s106, %s109
      %p118 = scmp.eq.s32.totalorder %s17, 1
      %p119 = por %p117, %p118
      %p120 = scmp.ne.s32.totalorder %s109, %s110
      %p121 = scmp.eq.s32.totalorder %s17, 0
      %p122 = por %p120, %p121
      %p123 = scmp.ne.s32.totalorder %s109, %s110
      %p124 = scmp.eq.s32.totalorder %s18, 1
      %p125 = por %p123, %p124
      %p127 = scmp.ne.s32.totalorder %s110, %s126
      %p128 = scmp.eq.s32.totalorder %s18, 0
      %p129 = por %p127, %p128
      %p130 = scmp.le.s32.totalorder 1, %s12
      %p131 = scmp.lt.s32.totalorder %s12, 3
      %p132 = pnand %p130, %p131
      %p133 = pneg %p132
      // Predicated region
      $region9: #{scm_embeding_forward.1} parent=5 // pred_check
        _
      $region10: #{scm_embeding_forward.1} parent=5 // pred_check_branch
        %135 = sbr.rel (%p132) target = $region12
      $region11: #{scm_embeding_forward.1} parent=5 // pred_region
        %s136 = ssub.s32 %s12, 1
        // Predicated region
        $region13: #{scm_embeding_forward.1} parent=11 // pred_check
          %p137 = pneg %p73
        $region14: #{scm_embeding_forward.1} parent=11 // pred_check_branch
          %139 = sbr.rel (%p137) target = $region16
        $region15: #{scm_embeding_forward.1} parent=11 // pred_region
          _
        $region16: #{scm_embeding_forward.1} parent=11 // pred_fallthru
          _
        // Predicated region
        $region17: #{scm_embeding_forward.1} parent=11 // pred_check
          %p140 = pneg %p94
        $region18: #{scm_embeding_forward.1} parent=11 // pred_check_branch
          %142 = sbr.rel (%p140) target = $region20
        $region19: #{scm_embeding_forward.1} parent=11 // pred_region
          _
        $region20: #{scm_embeding_forward.1} parent=11 // pred_fallthru
          _
      $region12: #{scm_embeding_forward.1} parent=5 // pred_fallthru
        _
      %p143 = scmp.lt.s32.totalorder %s12, 2
      // Predicated region
      $region21: #{scm_embeding_forward.1} parent=5 // pred_check
        %p144 = pneg %p143
      $region22: #{scm_embeding_forward.1} parent=5 // pred_check_branch
        %146 = sbr.rel (%p144) target = $region24
      $region23: #{scm_embeding_forward.1} parent=5 // pred_region
        // Predicated region
        $region25: #{scm_embeding_forward.1} parent=23 // pred_check
          %p147 = pneg %p46
        $region26: #{scm_embeding_forward.1} parent=23 // pred_check_branch
          %149 = sbr.rel (%p147) target = $region28
        $region27: #{scm_embeding_forward.1} parent=23 // pred_region
          %p150 = scmp.lt.s32.totalorder %s19, 1
          %s151 = scalar_select %p150, %s19, 1
          %p152 = scmp.lt.s32.totalorder %s20, 0
          %s153 = scalar_select %p152, %s20, 0
          %s154 = sadd.s32 %s153, %s151
          %s155 = smul.addr %s154, 8
          %s156 = scalar_lea.vmem %s0, %s155
        $region28: #{scm_embeding_forward.1} parent=23 // pred_fallthru
          _
      $region24: #{scm_embeding_forward.1} parent=5 // pred_fallthru
        _
      %p157 = scmp.le.s32.totalorder 1, %s12
      %p158 = scmp.lt.s32.totalorder %s12, 3
      %p159 = pnand %p157, %p158
      %p160 = pneg %p159
      // Predicated region
      $region29: #{scm_embeding_forward.1} parent=5 // pred_check
        _
      $region30: #{scm_embeding_forward.1} parent=5 // pred_check_branch
        %162 = sbr.rel (%p159) target = $region32
      $region31: #{scm_embeding_forward.1} parent=5 // pred_region
        %s163 = ssub.s32 %s12, 1
        %p164 = scmp.lt.s32.totalorder %s21, 1
        %s165 = scalar_select %p164, %s21, 1
        %p166 = scmp.lt.s32.totalorder %s22, 0
        %s167 = scalar_select %p166, %s22, 0
        %s168 = sadd.s32 %s167, %s165
        %s169 = smul.addr %s168, 8
        %s170 = scalar_lea.vmem %s0, %s169
        %p171 = pneg %p52
        %p172 = pneg %p49
        %p173 = pneg %p73
        %p174 = pneg %p70
        %p175 = pneg %p94
        %p176 = pneg %p91
        %p177 = pneg %p122
        %p178 = pneg %p119
        %s179 = sand.u32 %s109, 1
        %s180 = scalar_lea.sflag [#allocation3], %s179
        %s181 = sand.u32 %s109, 1
        %s182 = smul.addr %s181, 8
        %s183 = scalar_lea.vmem [#allocation2], %s182
        %p184 = scmp.lt.s32.totalorder %s21, 1
        %s185 = scalar_select %p184, %s21, 1
        %p186 = scmp.lt.s32.totalorder %s22, 0
        %s187 = scalar_select %p186, %s22, 0
        %s188 = sadd.s32 %s187, %s185
        %s189 = smul.addr %s188, 8
        %s190 = scalar_lea.vmem %s0, %s189
        %v191 = vld [vmem:[%s190] sm:$0xff]
        %192 = vxpose.xlu0.b32.start [1/16] %v191, 128
        %193 = vxpose.xlu0.b32.cont [2/16] 0.0, 128
        %194 = vxpose.xlu0.b32.cont [3/16] 0.0, 128
        %195 = vxpose.xlu0.b32.cont [4/16] 0.0, 128
        %196 = vxpose.xlu0.b32.cont [5/16] 0.0, 128
        %197 = vxpose.xlu0.b32.cont [6/16] 0.0, 128
        %198 = vxpose.xlu0.b32.cont [7/16] 0.0, 128
        %199 = vxpose.xlu0.b32.cont [8/16] 0.0, 128
        %200 = vxpose.xlu0.b32.cont [9/16] 0.0, 128
        %201 = vxpose.xlu0.b32.cont [10/16] 0.0, 128
        %202 = vxpose.xlu0.b32.cont [11/16] 0.0, 128
        %203 = vxpose.xlu0.b32.cont [12/16] 0.0, 128
        %204 = vxpose.xlu0.b32.cont [13/16] 0.0, 128
        %205 = vxpose.xlu0.b32.cont [14/16] 0.0, 128
        %206 = vxpose.xlu0.b32.cont [15/16] 0.0, 128
        %207 = vxpose.xlu0.b32.end [16/16] 0.0, 128
        %v208 = vpop.trf.xlu0
        %v209 = vpop.trf.xlu0
        %v210 = vpop.trf.xlu0
        %v211 = vpop.trf.xlu0
        %v212 = vpop.trf.xlu0
        %v213 = vpop.trf.xlu0
        %v214 = vpop.trf.xlu0
        %v215 = vpop.trf.xlu0
        %v216 = vpop.trf.xlu0
        %v217 = vpop.trf.xlu0
        %v218 = vpop.trf.xlu0
        %v219 = vpop.trf.xlu0
        %v220 = vpop.trf.xlu0
        %v221 = vpop.trf.xlu0
        %v222 = vpop.trf.xlu0
        %v223 = vpop.trf.xlu0
        %v224 = vld [vmem:[%s1] sm:$0xff]
        %v225 = vld [vmem:[%s2] sm:$0x1]
        %v227 = vlaneseq
        %v228 = vshrl.u32 %v227, 7
        %v229 = vsub.s32 0, %v228
        %v230 = vrot.slane %v225, %v229
        %vm232 = vcmask 64512
        %v234 = vsel %vm232, %v208, 0
        %236 = vmatprep.subr.mxu0 0.0
        %237 = vmatpush1.msra.mxu0 %v224
        %238 = vmatprep.subr.mxu0 0.0
        %239 = vmatpush1.msra.mxu0 0.0
        %240 = vmatprep.subr.mxu0 0.0
        %241 = vmatpush1.msra.mxu0 0.0
        %242 = vmatprep.subr.mxu0 0.0
        %243 = vmatpush1.msra.mxu0 0.0
        %244 = vmatprep.subr.mxu0 0.0
        %245 = vmatpush1.msra.mxu0 0.0
        %246 = vmatprep.subr.mxu0 0.0
        %247 = vmatpush1.msra.mxu0 0.0
        %248 = vmatprep.subr.mxu0 0.0
        %249 = vmatpush1.msra.mxu0 0.0
        %250 = vmatprep.subr.mxu0 0.0
        %251 = vmatpush1.msra.mxu0 0.0
        %252 = vmatprep.subr.mxu0 0.0
        %253 = vmatpush1.msra.mxu0 0.0
        %254 = vmatprep.subr.mxu0 0.0
        %255 = vmatpush1.msra.mxu0 0.0
        %256 = vmatprep.subr.mxu0 0.0
        %257 = vmatpush1.msra.mxu0 0.0
        %258 = vmatprep.subr.mxu0 0.0
        %259 = vmatpush1.msra.mxu0 0.0
        %260 = vmatprep.subr.mxu0 0.0
        %261 = vmatpush1.msra.mxu0 0.0
        %262 = vmatprep.subr.mxu0 0.0
        %263 = vmatpush1.msra.mxu0 0.0
        %264 = vmatprep.subr.mxu0 0.0
        %265 = vmatpush1.msra.mxu0 0.0
        %266 = vmatprep.subr.mxu0 0.0
        %267 = vmatpush1.msra.mxu0 0.0
        %268 = vmatprep.subr.mxu0 0.0
        %269 = vmatpush1.msra.mxu0 0.0
        %270 = vmatprep.subr.mxu0 0.0
        %271 = vmatpush1.msra.mxu0 0.0
        %272 = vmatprep.subr.mxu0 0.0
        %273 = vmatpush1.msra.mxu0 0.0
        %274 = vmatprep.subr.mxu0 0.0
        %275 = vmatpush1.msra.mxu0 0.0
        %276 = vmatprep.subr.mxu0 0.0
        %277 = vmatpush1.msra.mxu0 0.0
        %278 = vmatprep.subr.mxu0 0.0
        %279 = vmatpush1.msra.mxu0 0.0
        %280 = vmatprep.subr.mxu0 0.0
        %281 = vmatpush1.msra.mxu0 0.0
        %282 = vmatprep.subr.mxu0 0.0
        %283 = vmatpush1.msra.mxu0 0.0
        %284 = vmatprep.subr.mxu0 0.0
        %285 = vmatpush1.msra.mxu0 0.0
        %286 = vmatprep.subr.mxu0 0.0
        %287 = vmatpush1.msra.mxu0 0.0
        %288 = vmatprep.subr.mxu0 0.0
        %289 = vmatpush1.msra.mxu0 0.0
        %290 = vmatprep.subr.mxu0 0.0
        %291 = vmatpush1.msra.mxu0 0.0
        %292 = vmatprep.subr.mxu0 0.0
        %293 = vmatpush1.msra.mxu0 0.0
        %294 = vmatprep.subr.mxu0 0.0
        %295 = vmatpush1.msra.mxu0 0.0
        %296 = vmatprep.subr.mxu0 0.0
        %297 = vmatpush1.msra.mxu0 0.0
        %298 = vmatprep.subr.mxu0 0.0
        %299 = vmatpush1.msra.mxu0 0.0
        %300 = vmatprep.mubr.f32.mxu0 0.0
        %301 = vmatmul.mubr.f32.gmra.mrb[0].mxu0 %v234
        %v302 = vpop.f32.mrb[0].mxu0
        %v303 = vadd.f32 %v230, %v302
        %v304 = vpop.f32.mrb[0].mxu0
        %305 = vdwg.mxu0
        %vm306 = vcmask 261120
        %307 = vst.msk [vmem:[%s183] sm:$0xff] %vm306, %v303
        %s308 = sand.u32 %s109, 1
        %s309 = scalar_lea.sflag [#allocation3], %s308
        %s310 = sand.u32 %s109, 1
        %s311 = smul.addr %s310, 8
        %s312 = scalar_lea.vmem [#allocation2], %s311
        // Predicated region
        $region33: #{scm_embeding_forward.1} parent=31 // pred_check
          %p313 = pneg %p119
        $region34: #{scm_embeding_forward.1} parent=31 // pred_check_branch
          %315 = sbr.rel (%p313) target = $region36
        $region35: #{scm_embeding_forward.1} parent=31 // pred_region
          %s317 = ssub.s32 128, 128
          %318 = vsyncadd %s309, %s317
          %s319 = sadd.s32 %s22, %s21
          %s320 = smul.addr %s319, 128
          %s321 = scalar_lea.hbm %s3, %s320
          %s323 = sshll.u32 %s312, 4
          %s324 = int_to_ptr.vmem [resolvable:$true] %s323
          %326 = dma.vmem_to_hbm [thread:$0]  %s324, 128, %s321, %s309
        $region36: #{scm_embeding_forward.1} parent=31 // pred_fallthru
          _
      $region32: #{scm_embeding_forward.1} parent=5 // pred_fallthru
        _
      %p327 = scmp.le.s32.totalorder 2, %s12
      // Predicated region
      $region37: #{scm_embeding_forward.1} parent=5 // pred_check
        %p328 = pneg %p327
      $region38: #{scm_embeding_forward.1} parent=5 // pred_check_branch
        %330 = sbr.rel (%p328) target = $region40
      $region39: #{scm_embeding_forward.1} parent=5 // pred_region
        %s331 = ssub.s32 %s12, 2
        // Predicated region
        $region41: #{scm_embeding_forward.1} parent=39 // pred_check
          %p332 = pneg %p125
        $region42: #{scm_embeding_forward.1} parent=39 // pred_check_branch
          %334 = sbr.rel (%p332) target = $region44
        $region43: #{scm_embeding_forward.1} parent=39 // pred_region
          %s335 = sand.u32 %s110, 1
          %s336 = scalar_lea.sflag [#allocation3], %s335
          %s337 = sand.u32 %s110, 1
          %s338 = smul.addr %s337, 8
          %s339 = scalar_lea.vmem [#allocation2], %s338
          %340 = dma.done %s336, 128
        $region44: #{scm_embeding_forward.1} parent=39 // pred_fallthru
          _
      $region40: #{scm_embeding_forward.1} parent=5 // pred_fallthru
        _
    $region6: #{scm_embeding_forward.1} parent=1 // loop_footer
      %s16 = sadd.s32 1, %s12
    $region7: #{scm_embeding_forward.1} parent=1 // loop_footer_branch
      %11 = sbr.rel target = $region3
    $region8: #{scm_embeding_forward.1} parent=1 // loop_exit
      _
    %341 = vsyncpa [#allocation3], 1
    %s342 = scalar_lea.sflag [#allocation3], 1
    %343 = vsyncpa %s342, 1

</llo_original>
